<compile_context>
chip_gen: v7x
topology: tpu7x:2x2x1
jax: 0.10.0
libtpu: 0.0.40
codegen_flags: <defaults>
</compile_context>

<pallas_src>
import functools
import math

import jax
import jax.numpy as jnp
from jax import lax
from jax.experimental import pallas as pl
from jax.experimental.pallas import tpu as pltpu

# TODO(synk): dropout (p=0.0 by default in the module) is a no-op and is not
# implemented in-kernel.


def _pick_tile(n, candidates):
    for c in candidates:
        if n % c == 0:
            return c
    return n  # fall back to a single full-extent block


def _proj_kernel(x_ref, w_ref, asrc_ref, adst_ref,
                 out_ref, src_ref, dst_ref, smax_ref, smax_sc):
    i = pl.program_id(0)

    # Linear projection on the MXU: (TI, F_in) @ (F_in, C) -> (TI, C).
    out = jnp.dot(x_ref[...], w_ref[...], preferred_element_type=jnp.float32)
    out_ref[...] = out

    # Per-node attention logits on the MXU (contract the channel axis).
    src = lax.dot_general(out, asrc_ref[...], (((1,), (1,)), ((), ())),
                          preferred_element_type=jnp.float32)      # (TI, 1)
    dst = lax.dot_general(adst_ref[...], out, (((1,), (1,)), ((), ())),
                          preferred_element_type=jnp.float32)      # (1, TI)
    src_ref[...] = src
    dst_ref[...] = dst

    # Running global max of the src logits (used as softmax stabilizer).
    @pl.when(i == 0)
    def _():
        smax_sc[...] = jnp.full_like(smax_sc, -jnp.inf)

    smax_sc[...] = jnp.maximum(smax_sc[...],
                               jnp.max(src, axis=0, keepdims=True))

    @pl.when(i == pl.num_programs(0) - 1)
    def _():
        smax_ref[...] = smax_sc[...]


def _attn_kernel(adj_ref, src_ref, dst_ref, smax_ref, out_ref, bias_ref,
                 o_ref, acc_ref, colsum_ref, *,
                 ti, tj, negative_slope, add_self_loops, matmul_dtype):
    j = pl.program_id(0)          # output / column tile   ("parallel")
    i = pl.program_id(1)          # reduction / row tile   ("arbitrary")

    @pl.when(i == 0)
    def _():
        acc_ref[...] = jnp.zeros_like(acc_ref)
        colsum_ref[...] = jnp.zeros_like(colsum_ref)

    adj = adj_ref[...]                                          # (TI, TJ)
    if add_self_loops:
        # adj[k, k] = 1 done in-kernel: avoids materializing a second (N, N)
        # adjacency in HBM (saves ~2*N^2*4 bytes of HBM traffic).
        row_ids = lax.broadcasted_iota(jnp.int32, (ti, tj), 0) + i * ti
        col_ids = lax.broadcasted_iota(jnp.int32, (ti, tj), 1) + j * tj
        adj = jnp.where(row_ids == col_ids, 1.0, adj)

    s = src_ref[...]                                            # (TI, 1)
    d = dst_ref[...]                                            # (1, TJ)

    # Per-column stabilizer m_j = leaky(s_max + d_j) >= leaky(s_i + d_j) for
    # all i, so exp(...) <= 1 everywhere.  The per-column shift cancels in
    # the deferred normalization below.
    m = smax_ref[...] + d                                       # (1, TJ)
    m = jnp.maximum(m, negative_slope * m)

    logits = s + d                                              # (TI, TJ)
    logits = jnp.maximum(logits, negative_slope * logits)       # leaky relu
    e = jnp.exp(logits - m)                                     # EUP, (0, 1]

    w_den = adj * e      # adj   * exp(alpha): softmax denominator weights
    w_num = adj * w_den  # adj^2 * exp(alpha): numerator -- matches the
                         # reference's double adj multiply (== w_den for a
                         # binary adjacency).

    colsum_ref[...] += jnp.sum(w_den, axis=0, keepdims=True)    # (1, TJ)

    # Un-normalized aggregation: acc[c, jj] += sum_ii out[ii, c] * w_num[ii, jj].
    # dot_general contracts axis 0 of both operands, so neither the (TI, TJ)
    # attention tile nor the projected features are explicitly transposed;
    # the result is lane-dense (C, TJ).
    row0 = pl.multiple_of(i * ti, ti)
    out_tile = out_ref[pl.ds(row0, ti), :]                      # (TI, C) resident
    acc_ref[...] += lax.dot_general(
        out_tile.astype(matmul_dtype), w_num.astype(matmul_dtype),
        dimension_numbers=(((0,), (0,)), ((), ())),
        preferred_element_type=jnp.float32)

    @pl.when(i == pl.num_programs(1) - 1)
    def _():
        # Deferred softmax normalization: one (1, TJ) approximate reciprocal
        # (EUP) + a (C, TJ) row scale instead of O(N^2) f32 divides.
        inv = pl.reciprocal(colsum_ref[...], approx=True)       # (1, TJ)
        o_ref[...] = (acc_ref[...] * inv + bias_ref[...]).astype(o_ref.dtype)


def dense_gat_conv(x, adj, weight, att_src, att_dst, bias, *,
                   add_self_loops=True, negative_slope=0.2,
                   matmul_dtype=jnp.bfloat16):
    """DenseGATConv forward.

    x: (N, F_in), adj: (N, N), weight: (F_in, C), att_src/att_dst: (1, C),
    bias: (C,).  Returns (N, C) float32.
    """
    x = x.astype(jnp.float32)
    adj = adj.astype(jnp.float32)
    weight = weight.astype(jnp.float32)
    att_src = att_src.reshape(1, -1).astype(jnp.float32)
    att_dst = att_dst.reshape(1, -1).astype(jnp.float32)

    n = adj.shape[0]
    f_in = x.shape[1]
    c = weight.shape[1]
    bias_col = bias.reshape(c, 1).astype(jnp.float32)

    ti = _pick_tile(n, (256, 128))        # row (reduction) tile
    tj = _pick_tile(n, (512, 256, 128))   # column (output) tile, lane-dense

    # ---- Phase 1: projection + per-node attention logits -------------------
    out_lin, src_col, dst_row, s_max = pl.pallas_call(
        _proj_kernel,
        grid_spec=pltpu.PrefetchScalarGridSpec(
            num_scalar_prefetch=0,
            grid=(n // ti,),
            in_specs=[
                pl.BlockSpec((ti, f_in), lambda i: (i, 0)),
                pl.BlockSpec((f_in, c), lambda i: (0, 0)),
                pl.BlockSpec((1, c), lambda i: (0, 0)),
                pl.BlockSpec((1, c), lambda i: (0, 0)),
            ],
            out_specs=[
                pl.BlockSpec((ti, c), lambda i: (i, 0)),
                pl.BlockSpec((ti, 1), lambda i: (i, 0)),
                pl.BlockSpec((1, ti), lambda i: (0, i)),
                pl.BlockSpec((1, 1), lambda i: (0, 0)),
            ],
            scratch_shapes=[pltpu.VMEM((1, 1), jnp.float32)],
        ),
        out_shape=(
            jax.ShapeDtypeStruct((n, c), jnp.float32),
            jax.ShapeDtypeStruct((n, 1), jnp.float32),
            jax.ShapeDtypeStruct((1, n), jnp.float32),
            jax.ShapeDtypeStruct((1, 1), jnp.float32),
        ),
        compiler_params=pltpu.CompilerParams(
            dimension_semantics=("arbitrary",)),
    )(x, weight, att_src, att_dst)

    # ---- Phase 2: tiled attention softmax + aggregation --------------------
    kernel = functools.partial(
        _attn_kernel, ti=ti, tj=tj, negative_slope=negative_slope,
        add_self_loops=add_self_loops, matmul_dtype=matmul_dtype)

    o_t = pl.pallas_call(
        kernel,
        grid_spec=pltpu.PrefetchScalarGridSpec(
            num_scalar_prefetch=0,
            grid=(n // tj, n // ti),               # (parallel cols, reduction rows)
            in_specs=[
                pl.BlockSpec((ti, tj), lambda j, i: (i, j)),   # adj tile
                pl.BlockSpec((ti, 1), lambda j, i: (i, 0)),    # src logits (col)
                pl.BlockSpec((1, tj), lambda j, i: (0, j)),    # dst logits (row)
                pl.BlockSpec((1, 1), lambda j, i: (0, 0)),     # global src max
                pl.BlockSpec((n, c), lambda j, i: (0, 0)),     # projected feats (resident)
                pl.BlockSpec((c, 1), lambda j, i: (0, 0)),     # bias (column)
            ],
            out_specs=pl.BlockSpec((c, tj), lambda j, i: (0, j)),
            scratch_shapes=[
                pltpu.VMEM((c, tj), jnp.float32),    # aggregation accumulator
                pltpu.VMEM((1, tj), jnp.float32),    # softmax column sums
            ],
        ),
        out_shape=jax.ShapeDtypeStruct((c, n), jnp.float32),
        compiler_params=pltpu.CompilerParams(
            dimension_semantics=("parallel", "arbitrary"),
            vmem_limit_bytes=48 * 1024 * 1024),
    )(adj, src_col, dst_row, s_max, out_lin, bias_col)

    # Kernel writes (C, N) for lane-dense stores; present (N, C) to callers.
    return o_t.T


def _reference(x, adj, weight, att_src, att_dst, bias, add_self_loops=True,
               negative_slope=0.2):
    """Pure-JAX reference mirroring the PyTorch forward exactly."""
    n = adj.shape[0]
    if add_self_loops:
        idx = jnp.arange(n)
        adj = adj.at[idx, idx].set(1.0)
    out = x @ weight
    alpha_src = jnp.sum(out * att_src, axis=-1)
    alpha_dst = jnp.sum(out * att_dst, axis=-1)
    alpha = alpha_src[:, None] + alpha_dst[None, :]
    alpha = jnp.where(alpha >= 0.0, alpha, negative_slope * alpha)
    alpha = adj * jnp.exp(alpha)
    alpha = alpha / jnp.sum(alpha, axis=0, keepdims=True)
    return (adj * alpha).T @ out + bias[None, :]


if __name__ == "__main__":
    N = 16          # number of nodes
    F_IN = 8        # in_channels
    C = 32          # out_channels

    key = jax.random.PRNGKey(0)
    kx, kadj, kw, ks, kd = jax.random.split(key, 5)

    x = jax.random.normal(kx, (N, F_IN), dtype=jnp.float32)
    adj = jax.random.bernoulli(kadj, p=0.3, shape=(N, N)).astype(jnp.float32)

    stdv_w = math.sqrt(6.0 / (F_IN + C))
    weight = jax.random.uniform(kw, (F_IN, C), minval=-stdv_w, maxval=stdv_w,
                                dtype=jnp.float32)
    stdv_a = math.sqrt(6.0 / (1 + C))
    att_src = jax.random.uniform(ks, (1, C), minval=-stdv_a, maxval=stdv_a,
                                 dtype=jnp.float32)
    att_dst = jax.random.uniform(kd, (1, C), minval=-stdv_a, maxval=stdv_a,
                                 dtype=jnp.float32)
    bias = jnp.zeros((C,), dtype=jnp.float32)

    ref = _reference(x, adj, weight, att_src, att_dst, bias)

    # f32 aggregation-matmul path (tight check of the math / v5e config).
    out_f32 = dense_gat_conv(x, adj, weight, att_src, att_dst, bias,
                             matmul_dtype=jnp.float32)
    out_f32 = jax.block_until_ready(out_f32)
    assert out_f32.shape == (N, C)
    assert jnp.allclose(out_f32, ref, atol=5e-3, rtol=5e-3), "f32 mismatch"

    # Default bf16 aggregation-matmul path (v6e/v7x MXU), looser tolerance.
    out_bf16 = dense_gat_conv(x, adj, weight, att_src, att_dst, bias)
    out_bf16 = jax.block_until_ready(out_bf16)
    assert out_bf16.shape == (N, C)
    assert jnp.allclose(out_bf16, ref, atol=5e-2, rtol=5e-2), "bf16 mismatch"

    print("KERNEL_OK")
</pallas_src>

<mosaic_0001>
module attributes {stable_mosaic.version = 11 : i64} {
  func.func @_proj_kernel(%arg0: i32, %arg1: memref<16x8xf32, #tpu.memory_space<vmem>>, %arg2: memref<8x32xf32, #tpu.memory_space<vmem>>, %arg3: memref<1x32xf32, #tpu.memory_space<vmem>>, %arg4: memref<1x32xf32, #tpu.memory_space<vmem>>, %arg5: memref<16x32xf32, #tpu.memory_space<vmem>>, %arg6: memref<16x1xf32, #tpu.memory_space<vmem>>, %arg7: memref<1x16xf32, #tpu.memory_space<vmem>>, %arg8: memref<1x1xf32, #tpu.memory_space<vmem>>, %arg9: memref<1x1xf32, #tpu.memory_space<vmem>>) attributes {dimension_semantics = [#tpu.dimension_semantics<arbitrary>], iteration_bounds = array<i64: 1>, scalar_prefetch = 0 : i64, scratch_operands = 1 : i64, tpu.core_type = #tpu.core_type<tc>, window_params = [{transform_indices = @transform_0, window_bounds = array<i64: 16, 8>}, {pipeline_mode = #tpu.pipeline_mode<synchronous>, transform_indices = @transform_1, window_bounds = array<i64: 8, 32>}, {pipeline_mode = #tpu.pipeline_mode<synchronous>, transform_indices = @transform_2, window_bounds = array<i64: 1, 32>}, {pipeline_mode = #tpu.pipeline_mode<synchronous>, transform_indices = @transform_3, window_bounds = array<i64: 1, 32>}, {transform_indices = @transform_4, window_bounds = array<i64: 16, 32>}, {transform_indices = @transform_5, window_bounds = array<i64: 16, 1>}, {transform_indices = @transform_6, window_bounds = array<i64: 1, 16>}, {pipeline_mode = #tpu.pipeline_mode<synchronous>, transform_indices = @transform_7, window_bounds = array<i64: 1, 1>}]} {
    %c0 = arith.constant 0 : index
    %c0_0 = arith.constant 0 : index
    %0 = vector.load %arg1[%c0, %c0_0] : memref<16x8xf32, #tpu.memory_space<vmem>>, vector<16x8xf32>
    %c0_1 = arith.constant 0 : index
    %c0_2 = arith.constant 0 : index
    %1 = vector.load %arg2[%c0_1, %c0_2] : memref<8x32xf32, #tpu.memory_space<vmem>>, vector<8x32xf32>
    %cst = arith.constant dense<0.000000e+00> : vector<16x32xf32>
    %2 = tpu.matmul %0, %1, %cst {dimension_numbers = #tpu.dot_dimension_numbers<[1], [0], [0], [1], [0, 0, 1, 1], [], []>} : vector<16x8xf32>, vector<8x32xf32>, vector<16x32xf32> -> vector<16x32xf32>
    %c0_3 = arith.constant 0 : index
    %c0_4 = arith.constant 0 : index
    %3 = vector.load %arg5[%c0_3, %c0_4] : memref<16x32xf32, #tpu.memory_space<vmem>>, vector<16x32xf32>
    tpu.vector_store %arg5[%c0_3, %c0_4], %2 {strides = array<i32>} : memref<16x32xf32, #tpu.memory_space<vmem>>, vector<16x32xf32>,
    %c0_5 = arith.constant 0 : index
    %c0_6 = arith.constant 0 : index
    %4 = vector.load %arg3[%c0_5, %c0_6] : memref<1x32xf32, #tpu.memory_space<vmem>>, vector<1x32xf32>
    %cst_7 = arith.constant dense<0.000000e+00> : vector<16x1xf32>
    %5 = tpu.matmul %2, %4, %cst_7 {dimension_numbers = #tpu.dot_dimension_numbers<[1], [1], [0], [0], [0, 0, 1, 0], [], []>} : vector<16x32xf32>, vector<1x32xf32>, vector<16x1xf32> -> vector<16x1xf32>
    %c0_8 = arith.constant 0 : index
    %c0_9 = arith.constant 0 : index
    %6 = vector.load %arg4[%c0_8, %c0_9] : memref<1x32xf32, #tpu.memory_space<vmem>>, vector<1x32xf32>
    %cst_10 = arith.constant dense<0.000000e+00> : vector<1x16xf32>
    %7 = tpu.matmul %6, %2, %cst_10 {dimension_numbers = #tpu.dot_dimension_numbers<[1], [1], [0], [0], [0, 0, 1, 0], [], []>} : vector<1x32xf32>, vector<16x32xf32>, vector<1x16xf32> -> vector<1x16xf32>
    %c0_11 = arith.constant 0 : index
    %c0_12 = arith.constant 0 : index
    %8 = vector.load %arg6[%c0_11, %c0_12] : memref<16x1xf32, #tpu.memory_space<vmem>>, vector<16x1xf32>
    tpu.vector_store %arg6[%c0_11, %c0_12], %5 {strides = array<i32>} : memref<16x1xf32, #tpu.memory_space<vmem>>, vector<16x1xf32>,
    %c0_13 = arith.constant 0 : index
    %c0_14 = arith.constant 0 : index
    %9 = vector.load %arg7[%c0_13, %c0_14] : memref<1x16xf32, #tpu.memory_space<vmem>>, vector<1x16xf32>
    tpu.vector_store %arg7[%c0_13, %c0_14], %7 {strides = array<i32>} : memref<1x16xf32, #tpu.memory_space<vmem>>, vector<1x16xf32>,
    %c0_i32 = arith.constant 0 : i32
    %10 = arith.cmpi eq, %arg0, %c0_i32 : i32
    %11 = arith.extui %10 : i1 to i32
    %c0_i32_15 = arith.constant 0 : i32
    %12 = arith.cmpi ne, %11, %c0_i32_15 : i32
    scf.if %12 {
      %cst_23 = arith.constant 0xFF800000 : f32
      %21 = vector.broadcast %cst_23 : f32 to vector<1x1xf32>
      %c0_24 = arith.constant 0 : index
      %c0_25 = arith.constant 0 : index
      %22 = vector.load %arg9[%c0_24, %c0_25] : memref<1x1xf32, #tpu.memory_space<vmem>>, vector<1x1xf32>
      tpu.vector_store %arg9[%c0_24, %c0_25], %21 {strides = array<i32>} : memref<1x1xf32, #tpu.memory_space<vmem>>, vector<1x1xf32>,
    } else {
    }
    %c0_16 = arith.constant 0 : index
    %c0_17 = arith.constant 0 : index
    %13 = vector.load %arg9[%c0_16, %c0_17] : memref<1x1xf32, #tpu.memory_space<vmem>>, vector<1x1xf32>
    %cst_18 = arith.constant dense<0xFF800000> : vector<1xf32>
    %14 = vector.multi_reduction <maximumf>, %5, %cst_18 [0] : vector<16x1xf32> to vector<1xf32>
    %15 = vector.shape_cast %14 : vector<1xf32> to vector<1x1xf32>
    %16 = arith.maximumf %13, %15 : vector<1x1xf32>
    %c0_19 = arith.constant 0 : index
    %c0_20 = arith.constant 0 : index
    %17 = vector.load %arg9[%c0_19, %c0_20] : memref<1x1xf32, #tpu.memory_space<vmem>>, vector<1x1xf32>
    tpu.vector_store %arg9[%c0_19, %c0_20], %16 {strides = array<i32>} : memref<1x1xf32, #tpu.memory_space<vmem>>, vector<1x1xf32>,
    %c0_i32_21 = arith.constant 0 : i32
    %18 = arith.cmpi eq, %arg0, %c0_i32_21 : i32
    %19 = arith.extui %18 : i1 to i32
    %c0_i32_22 = arith.constant 0 : i32
    %20 = arith.cmpi ne, %19, %c0_i32_22 : i32
    scf.if %20 {
      %c0_23 = arith.constant 0 : index
      %c0_24 = arith.constant 0 : index
      %21 = vector.load %arg9[%c0_23, %c0_24] : memref<1x1xf32, #tpu.memory_space<vmem>>, vector<1x1xf32>
      %c0_25 = arith.constant 0 : index
      %c0_26 = arith.constant 0 : index
      %22 = vector.load %arg8[%c0_25, %c0_26] : memref<1x1xf32, #tpu.memory_space<vmem>>, vector<1x1xf32>
      tpu.vector_store %arg8[%c0_25, %c0_26], %21 {strides = array<i32>} : memref<1x1xf32, #tpu.memory_space<vmem>>, vector<1x1xf32>,
    } else {
    }
    return
  }
  func.func @transform_0(%arg0: i32) -> (i32, i32) {
    %c0_i32 = arith.constant 0 : i32
    %c0_i32_0 = arith.constant 0 : i32
    return %arg0, %c0_i32 : i32, i32
  }
  func.func @transform_1(%arg0: i32) -> (i32, i32) {
    %c0_i32 = arith.constant 0 : i32
    %c0_i32_0 = arith.constant 0 : i32
    %c0_i32_1 = arith.constant 0 : i32
    return %c0_i32, %c0_i32_0 : i32, i32
  }
  func.func @transform_2(%arg0: i32) -> (i32, i32) {
    %c0_i32 = arith.constant 0 : i32
    %c0_i32_0 = arith.constant 0 : i32
    %c0_i32_1 = arith.constant 0 : i32
    return %c0_i32, %c0_i32_0 : i32, i32
  }
  func.func @transform_3(%arg0: i32) -> (i32, i32) {
    %c0_i32 = arith.constant 0 : i32
    %c0_i32_0 = arith.constant 0 : i32
    %c0_i32_1 = arith.constant 0 : i32
    return %c0_i32, %c0_i32_0 : i32, i32
  }
  func.func @transform_4(%arg0: i32) -> (i32, i32) {
    %c0_i32 = arith.constant 0 : i32
    %c0_i32_0 = arith.constant 0 : i32
    return %arg0, %c0_i32 : i32, i32
  }
  func.func @transform_5(%arg0: i32) -> (i32, i32) {
    %c0_i32 = arith.constant 0 : i32
    %c0_i32_0 = arith.constant 0 : i32
    return %arg0, %c0_i32 : i32, i32
  }
  func.func @transform_6(%arg0: i32) -> (i32, i32) {
    %c0_i32 = arith.constant 0 : i32
    %c0_i32_0 = arith.constant 0 : i32
    return %c0_i32, %arg0 : i32, i32
  }
  func.func @transform_7(%arg0: i32) -> (i32, i32) {
    %c0_i32 = arith.constant 0 : i32
    %c0_i32_0 = arith.constant 0 : i32
    %c0_i32_1 = arith.constant 0 : i32
    return %c0_i32, %c0_i32_0 : i32, i32
  }
}

</mosaic_0001>

<llo_original>
// kernel: tpu_custom_call.1
$region0: #{tpu_custom_call.1}
  #allocation0 [shape = 'u32[]', space=smem, size = 0x4, offset = 0x4, fixed_abs, tag = 'smem constant byte address 0x4 - core index']
  #allocation1 [shape = 'u32[144,128]{1,0:T(1,128)}', space=vmem, size = 0x12000, scoped, tag = 'internal scratch']
  #allocation2 [shape = 'f32[1,1]{1,0:T(1,128)}', space=vmem, size = 0x200, scoped, tag = 'scratch operand']
  %s0 = inlined_call_operand.vmem [shape: f32[16,8], index: 0, kind: input, shape index: {}]
  %s1 = inlined_call_operand.vmem [shape: f32[8,32], index: 1, kind: input, shape index: {}]
  %s2 = inlined_call_operand.vmem [shape: f32[1,32], index: 2, kind: input, shape index: {}]
  %s3 = inlined_call_operand.vmem [shape: f32[1,32], index: 3, kind: input, shape index: {}]
  %s4 = inlined_call_operand.hbm [shape: f32[16,32], index: 4, kind: output, shape index: {0}]
  %s5 = inlined_call_operand.vmem [shape: f32[16,1], index: 5, kind: output, shape index: {1}]
  %s6 = inlined_call_operand.hbm [shape: f32[1,16], index: 6, kind: output, shape index: {2}]
  %s7 = inlined_call_operand.hbm [shape: f32[1,1], index: 7, kind: output, shape index: {3}]
  %8 = xla_tuple %s4, %s5, %s6, %s7
  %s9 = sld [smem:[#allocation0]]
  $region58: #{tpu_custom_call.1} parent=0
    _
  %s11 = ssub.s32 1, %s9
  %s12 = scalar_select 0, %s11, %s9
  $region1: #{tpu_custom_call.1} parent=0
    #allocation3 [shape = 'u8[8192]{0}', space=vmem, size = 0x2000, scoped, tag = 'output window, operand 0, single buffered']
    #allocation4 [shape = 's32[1]{0}', space=sflag, size = 0x4, scoped, tag = 'scoped memory for tpu_custom_call.1']
    #allocation5 [shape = 'u8[512]{0}', space=vmem, size = 0x400, scoped, tag = 'output window, operand 2, single buffered']
    #allocation6 [shape = 's32[1]{0}', space=sflag, size = 0x4, scoped, tag = 'scoped memory for tpu_custom_call.1']
    #allocation7 [shape = 'u8[512]{0}', space=vmem, size = 0x400, scoped, tag = 'output window, operand 3, single buffered']
    %13 = vsyncpa [#allocation4], 0
    %14 = vsyncpa [#allocation6], 0
    // Predicated region
    $region2: #{tpu_custom_call.1} parent=1 // pred_check
      _
    $region3: #{tpu_custom_call.1} parent=1 // pred_check_branch
      %16 = sbr.rel (0) target = $region5
    $region4: #{tpu_custom_call.1} parent=1 // pred_region
      _
    $region5: #{tpu_custom_call.1} parent=1 // pred_fallthru
      _
    // Predicated region
    $region6: #{tpu_custom_call.1} parent=1 // pred_check
      _
    $region7: #{tpu_custom_call.1} parent=1 // pred_check_branch
      %18 = sbr.rel (0) target = $region9
    $region8: #{tpu_custom_call.1} parent=1 // pred_region
      _
    $region9: #{tpu_custom_call.1} parent=1 // pred_fallthru
      _
    // Predicated region
    $region10: #{tpu_custom_call.1} parent=1 // pred_check
      _
    $region11: #{tpu_custom_call.1} parent=1 // pred_check_branch
      %20 = sbr.rel (0) target = $region13
    $region12: #{tpu_custom_call.1} parent=1 // pred_region
      _
    $region13: #{tpu_custom_call.1} parent=1 // pred_fallthru
      _
    // Predicated region
    $region14: #{tpu_custom_call.1} parent=1 // pred_check
      _
    $region15: #{tpu_custom_call.1} parent=1 // pred_check_branch
      %22 = sbr.rel (0) target = $region17
    $region16: #{tpu_custom_call.1} parent=1 // pred_region
      _
    $region17: #{tpu_custom_call.1} parent=1 // pred_fallthru
      _
    %v23 = vld [vmem:[%s0] sm:$0xff]
    %v24 = vld [vmem:[%s0 + $0x8] sm:$0xff]
    %v25 = vld [vmem:[%s1] sm:$0xff]
    %vm26 = vcmask 64512
    %v28 = vsel %vm26, %v23, 0
    %v31 = vsel %vm26, %v24, 0
    %33 = vmatprep.subr.mxu0 0.0
    %34 = vmatpush1.msra.mxu0 %v25
    %35 = vmatprep.subr.mxu0 0.0
    %36 = vmatpush1.msra.mxu0 0.0
    %37 = vmatprep.subr.mxu0 0.0
    %38 = vmatpush1.msra.mxu0 0.0
    %39 = vmatprep.subr.mxu0 0.0
    %40 = vmatpush1.msra.mxu0 0.0
    %41 = vmatprep.subr.mxu0 0.0
    %42 = vmatpush1.msra.mxu0 0.0
    %43 = vmatprep.subr.mxu0 0.0
    %44 = vmatpush1.msra.mxu0 0.0
    %45 = vmatprep.subr.mxu0 0.0
    %46 = vmatpush1.msra.mxu0 0.0
    %47 = vmatprep.subr.mxu0 0.0
    %48 = vmatpush1.msra.mxu0 0.0
    %49 = vmatprep.subr.mxu0 0.0
    %50 = vmatpush1.msra.mxu0 0.0
    %51 = vmatprep.subr.mxu0 0.0
    %52 = vmatpush1.msra.mxu0 0.0
    %53 = vmatprep.subr.mxu0 0.0
    %54 = vmatpush1.msra.mxu0 0.0
    %55 = vmatprep.subr.mxu0 0.0
    %56 = vmatpush1.msra.mxu0 0.0
    %57 = vmatprep.subr.mxu0 0.0
    %58 = vmatpush1.msra.mxu0 0.0
    %59 = vmatprep.subr.mxu0 0.0
    %60 = vmatpush1.msra.mxu0 0.0
    %61 = vmatprep.subr.mxu0 0.0
    %62 = vmatpush1.msra.mxu0 0.0
    %63 = vmatprep.subr.mxu0 0.0
    %64 = vmatpush1.msra.mxu0 0.0
    %65 = vmatprep.subr.mxu0 0.0
    %66 = vmatpush1.msra.mxu0 0.0
    %67 = vmatprep.subr.mxu0 0.0
    %68 = vmatpush1.msra.mxu0 0.0
    %69 = vmatprep.subr.mxu0 0.0
    %70 = vmatpush1.msra.mxu0 0.0
    %71 = vmatprep.subr.mxu0 0.0
    %72 = vmatpush1.msra.mxu0 0.0
    %73 = vmatprep.subr.mxu0 0.0
    %74 = vmatpush1.msra.mxu0 0.0
    %75 = vmatprep.subr.mxu0 0.0
    %76 = vmatpush1.msra.mxu0 0.0
    %77 = vmatprep.subr.mxu0 0.0
    %78 = vmatpush1.msra.mxu0 0.0
    %79 = vmatprep.subr.mxu0 0.0
    %80 = vmatpush1.msra.mxu0 0.0
    %81 = vmatprep.subr.mxu0 0.0
    %82 = vmatpush1.msra.mxu0 0.0
    %83 = vmatprep.subr.mxu0 0.0
    %84 = vmatpush1.msra.mxu0 0.0
    %85 = vmatprep.subr.mxu0 0.0
    %86 = vmatpush1.msra.mxu0 0.0
    %87 = vmatprep.subr.mxu0 0.0
    %88 = vmatpush1.msra.mxu0 0.0
    %89 = vmatprep.subr.mxu0 0.0
    %90 = vmatpush1.msra.mxu0 0.0
    %91 = vmatprep.subr.mxu0 0.0
    %92 = vmatpush1.msra.mxu0 0.0
    %93 = vmatprep.subr.mxu0 0.0
    %94 = vmatpush1.msra.mxu0 0.0
    %95 = vmatprep.subr.mxu0 0.0
    %96 = vmatpush1.msra.mxu0 0.0
    %97 = vmatprep.mubr.f32.mxu0 0.0
    %98 = vmatmul.mubr.f32.gmra.mrb[0].mxu0 %v28
    %v99 = vpop.f32.mrb[0].mxu0
    %v100 = vadd.f32 0.0, %v99
    %v101 = vpop.f32.mrb[0].mxu0
    %102 = vmatprep.mubr.f32.mxu0 0.0
    %103 = vmatmul.mubr.f32.gmra.mrb[0].mxu0 %v31
    %v104 = vpop.f32.mrb[0].mxu0
    %v105 = vadd.f32 0.0, %v104
    %v106 = vpop.f32.mrb[0].mxu0
    %107 = vdwg.mxu0
    %vm108 = vcmask 261120
    %109 = vst.msk [vmem:[#allocation3] sm:$0xff] %vm108, %v100
    %110 = vst.msk [vmem:[#allocation3 + $0x8] sm:$0xff] %vm108, %v105
    %v111 = vld [vmem:[%s2] sm:$0x1]
    %v113 = vlaneseq
    %v114 = vshrl.u32 %v113, 7
    %v115 = vsub.s32 0, %v114
    %v116 = vrot.slane %v111, %v115
    %v118 = vmul.f32 %v100, %v116
    %v119 = vmul.f32 %v105, %v116
    %v120 = vsel %vm108, %v118, 0.0
    %121 = vadd.xlane.f32.xlu0 %v120
    %v122 = vpop.xlane.xlu0 %121
    %v123 = vsel %vm108, %v119, 0.0
    %124 = vadd.xlane.f32.xlu0 %v123
    %v125 = vpop.xlane.xlu0 %124
    %v126 = vld [vmem:[%s3] sm:$0x1]
    %v128 = vsel %vm108, %v126, 0
    %v131 = vsel %vm108, %v100, 0
    %v134 = vsel %vm108, %v105, 0
    %136 = vmatprep.subr.mxu0 0.0
    %137 = vmatpush1.xpose.msra.mxu0 %v131
    %138 = vmatprep.subr.mxu0 0.0
    %139 = vmatpush1.xpose.msra.mxu0 %v134
    %140 = vmatprep.subr.mxu0 0.0
    %141 = vmatpush1.xpose.msra.mxu0 0.0
    %142 = vmatprep.subr.mxu0 0.0
    %143 = vmatpush1.xpose.msra.mxu0 0.0
    %144 = vmatprep.subr.mxu0 0.0
    %145 = vmatpush1.xpose.msra.mxu0 0.0
    %146 = vmatprep.subr.mxu0 0.0
    %147 = vmatpush1.xpose.msra.mxu0 0.0
    %148 = vmatprep.subr.mxu0 0.0
    %149 = vmatpush1.xpose.msra.mxu0 0.0
    %150 = vmatprep.subr.mxu0 0.0
    %151 = vmatpush1.xpose.msra.mxu0 0.0
    %152 = vmatprep.subr.mxu0 0.0
    %153 = vmatpush1.xpose.msra.mxu0 0.0
    %154 = vmatprep.subr.mxu0 0.0
    %155 = vmatpush1.xpose.msra.mxu0 0.0
    %156 = vmatprep.subr.mxu0 0.0
    %157 = vmatpush1.xpose.msra.mxu0 0.0
    %158 = vmatprep.subr.mxu0 0.0
    %159 = vmatpush1.xpose.msra.mxu0 0.0
    %160 = vmatprep.subr.mxu0 0.0
    %161 = vmatpush1.xpose.msra.mxu0 0.0
    %162 = vmatprep.subr.mxu0 0.0
    %163 = vmatpush1.xpose.msra.mxu0 0.0
    %164 = vmatprep.subr.mxu0 0.0
    %165 = vmatpush1.xpose.msra.mxu0 0.0
    %166 = vmatprep.subr.mxu0 0.0
    %167 = vmatpush1.xpose.msra.mxu0 0.0
    %168 = vmatprep.subr.mxu0 0.0
    %169 = vmatpush1.xpose.msra.mxu0 0.0
    %170 = vmatprep.subr.mxu0 0.0
    %171 = vmatpush1.xpose.msra.mxu0 0.0
    %172 = vmatprep.subr.mxu0 0.0
    %173 = vmatpush1.xpose.msra.mxu0 0.0
    %174 = vmatprep.subr.mxu0 0.0
    %175 = vmatpush1.xpose.msra.mxu0 0.0
    %176 = vmatprep.subr.mxu0 0.0
    %177 = vmatpush1.xpose.msra.mxu0 0.0
    %178 = vmatprep.subr.mxu0 0.0
    %179 = vmatpush1.xpose.msra.mxu0 0.0
    %180 = vmatprep.subr.mxu0 0.0
    %181 = vmatpush1.xpose.msra.mxu0 0.0
    %182 = vmatprep.subr.mxu0 0.0
    %183 = vmatpush1.xpose.msra.mxu0 0.0
    %184 = vmatprep.subr.mxu0 0.0
    %185 = vmatpush1.xpose.msra.mxu0 0.0
    %186 = vmatprep.subr.mxu0 0.0
    %187 = vmatpush1.xpose.msra.mxu0 0.0
    %188 = vmatprep.subr.mxu0 0.0
    %189 = vmatpush1.xpose.msra.mxu0 0.0
    %190 = vmatprep.subr.mxu0 0.0
    %191 = vmatpush1.xpose.msra.mxu0 0.0
    %192 = vmatprep.subr.mxu0 0.0
    %193 = vmatpush1.xpose.msra.mxu0 0.0
    %194 = vmatprep.subr.mxu0 0.0
    %195 = vmatpush1.xpose.msra.mxu0 0.0
    %196 = vmatprep.subr.mxu0 0.0
    %197 = vmatpush1.xpose.msra.mxu0 0.0
    %198 = vmatprep.subr.mxu0 0.0
    %199 = vmatpush1.xpose.msra.mxu0 0.0
    %200 = vmatprep.mubr.f32.mxu0 0.0
    %201 = vmatmul.mubr.f32.gmra.mrb[0].mxu0 %v128
    %v202 = vpop.f32.mrb[0].mxu0
    %v203 = vadd.f32 0.0, %v202
    %v204 = vpop.f32.mrb[0].mxu0
    %205 = vdwg.mxu0
    %vm206 = vcmask 7168
    %207 = vst.msk [vmem:[%s5] sm:$0xff] %vm206, %v122
    %208 = vst.msk [vmem:[%s5 + $0x8] sm:$0xff] %vm206, %v125
    %vm209 = vcmask 122880
    %210 = vst.msk [vmem:[#allocation5] sm:$0x1] %vm209, %v203
    %p211 = scmp.eq.s32.totalorder 0, 0
    // Predicated region
    $region18: #{tpu_custom_call.1} parent=1 // pred_check
      %p212 = pneg %p211
    $region19: #{tpu_custom_call.1} parent=1 // pred_check_branch
      %214 = sbr.rel (%p212) target = $region21
    $region20: #{tpu_custom_call.1} parent=1 // pred_region
      %vm215 = vcmask 0
      %216 = vst.msk [vmem:[#allocation2] sm:$0x1] %vm215, -inf
    $region21: #{tpu_custom_call.1} parent=1 // pred_fallthru
      _
    %v217 = vld [vmem:[#allocation2] sm:$0x1]
    %v218 = vmax.f32 %v122, %v125
    %v219 = vrot.slane %v218, 4
    %v220 = vmax.f32 %v218, %v219
    %v221 = vrot.slane %v220, 2
    %v222 = vmax.f32 %v220, %v221
    %v223 = vrot.slane %v222, 1
    %v224 = vmax.f32 %v222, %v223
    %v225 = vmax.f32 %v217, %v224
    %vm226 = vcmask 0
    %227 = vst.msk [vmem:[#allocation2] sm:$0x1] %vm226, %v225
    // Predicated region
    $region22: #{tpu_custom_call.1} parent=1 // pred_check
      %p228 = pneg %p211
    $region23: #{tpu_custom_call.1} parent=1 // pred_check_branch
      %230 = sbr.rel (%p228) target = $region25
    $region24: #{tpu_custom_call.1} parent=1 // pred_region
      %v231 = vld [vmem:[#allocation2] sm:$0x1]
      %232 = vst.msk [vmem:[#allocation7] sm:$0x1] %vm226, %v231
    $region25: #{tpu_custom_call.1} parent=1 // pred_fallthru
      _
    // Predicated region
    $region26: #{tpu_custom_call.1} parent=1 // pred_check
      _
    $region27: #{tpu_custom_call.1} parent=1 // pred_check_branch
      %234 = sbr.rel (0) target = $region29
    $region28: #{tpu_custom_call.1} parent=1 // pred_region
      %s236 = ssub.s32 256, 256
      %237 = vsyncadd [#allocation4], %s236
      %s238 = sshll.u32 [#allocation3], 4
      %s239 = int_to_ptr.vmem [resolvable:$true] %s238
      %244 = dma.vmem_to_hbm [thread:$0]  %s239, 256, %s4, [#allocation4], 128, 128, 8
    $region29: #{tpu_custom_call.1} parent=1 // pred_fallthru
      _
    // Predicated region
    $region30: #{tpu_custom_call.1} parent=1 // pred_check
      _
    $region31: #{tpu_custom_call.1} parent=1 // pred_check_branch
      %246 = sbr.rel (0) target = $region33
    $region32: #{tpu_custom_call.1} parent=1 // pred_region
      _
    $region33: #{tpu_custom_call.1} parent=1 // pred_fallthru
      _
    // Predicated region
    $region34: #{tpu_custom_call.1} parent=1 // pred_check
      _
    $region35: #{tpu_custom_call.1} parent=1 // pred_check_branch
      %248 = sbr.rel (0) target = $region37
    $region36: #{tpu_custom_call.1} parent=1 // pred_region
      %s250 = ssub.s32 16, 16
      %251 = vsyncadd [#allocation6], %s250
      %s253 = sshll.u32 [#allocation5], 4
      %s254 = int_to_ptr.vmem [resolvable:$true] %s253
      %256 = dma.vmem_to_hbm [thread:$0]  %s254, 16, %s6, [#allocation6]
    $region37: #{tpu_custom_call.1} parent=1 // pred_fallthru
      _
    // Predicated region
    $region38: #{tpu_custom_call.1} parent=1 // pred_check
      _
    $region39: #{tpu_custom_call.1} parent=1 // pred_check_branch
      %258 = sbr.rel (0) target = $region41
    $region40: #{tpu_custom_call.1} parent=1 // pred_region
      %s260 = ssub.s32 16, 16
      %261 = vsyncadd [#allocation6], %s260
      %s263 = sshll.u32 [#allocation7], 4
      %s264 = int_to_ptr.vmem [resolvable:$true] %s263
      %266 = dma.vmem_to_hbm [thread:$0]  %s264, 16, %s7, [#allocation6]
    $region41: #{tpu_custom_call.1} parent=1 // pred_fallthru
      _
    // Predicated region
    $region42: #{tpu_custom_call.1} parent=1 // pred_check
      _
    $region43: #{tpu_custom_call.1} parent=1 // pred_check_branch
      %268 = sbr.rel (0) target = $region45
    $region44: #{tpu_custom_call.1} parent=1 // pred_region
      %269 = dma.done [#allocation4], 256
    $region45: #{tpu_custom_call.1} parent=1 // pred_fallthru
      _
    // Predicated region
    $region46: #{tpu_custom_call.1} parent=1 // pred_check
      _
    $region47: #{tpu_custom_call.1} parent=1 // pred_check_branch
      %271 = sbr.rel (0) target = $region49
    $region48: #{tpu_custom_call.1} parent=1 // pred_region
      _
    $region49: #{tpu_custom_call.1} parent=1 // pred_fallthru
      _
    // Predicated region
    $region50: #{tpu_custom_call.1} parent=1 // pred_check
      _
    $region51: #{tpu_custom_call.1} parent=1 // pred_check_branch
      %273 = sbr.rel (0) target = $region53
    $region52: #{tpu_custom_call.1} parent=1 // pred_region
      %274 = dma.done [#allocation6], 16
    $region53: #{tpu_custom_call.1} parent=1 // pred_fallthru
      _
    // Predicated region
    $region54: #{tpu_custom_call.1} parent=1 // pred_check
      _
    $region55: #{tpu_custom_call.1} parent=1 // pred_check_branch
      %276 = sbr.rel (0) target = $region57
    $region56: #{tpu_custom_call.1} parent=1 // pred_region
      %277 = dma.done [#allocation6], 16
    $region57: #{tpu_custom_call.1} parent=1 // pred_fallthru
      _
    %278 = vsyncpa [#allocation4], 1
    %279 = vsyncpa [#allocation6], 1

</llo_original>
